<compile_context>
chip_gen: v7x
topology: tpu7x:2x2x1
jax: 0.10.0
libtpu: 0.0.40
codegen_flags: <defaults>
</compile_context>

<pallas_src>
import jax
import jax.numpy as jnp
from jax import lax
from jax.experimental import pallas as pl
from jax.experimental.pallas import tpu as pltpu

SELU_ALPHA = 1.6732632423543772
SELU_SCALE = 1.0507009873554805


def _selu(x):
    # exp(min(x,0)) avoids inf in the unselected branch of where().
    return SELU_SCALE * jnp.where(
        x > 0, x, SELU_ALPHA * (jnp.exp(jnp.minimum(x, 0.0)) - 1.0))


# ----------------------------- Pallas kernel --------------------------------


def _fused_kernel(x_ref, cw_ref, cb_ref, sel_ref, fw_ref, fb_ref,
                  sw_ref, sb_ref, hw_ref, hb_ref, out_ref):
    """conv3x3(+SELU) + GAP + fc + s2s(+SELU) + both heads, fused."""
    # 3x3 'same' conv as a single banded matmul over row-triples.
    act = jnp.dot(x_ref[...], cw_ref[...],
                  preferred_element_type=jnp.float32) + cb_ref[...]
    act = _selu(act)                                        # (B*T*H, W*K) f32

    # Global average pool: mean over H via selection matmul (sel carries the
    # full 1/(H*W)); mean over W is folded into the W-tiled fc weight.
    pooled = jnp.dot(sel_ref[...], act.astype(jnp.bfloat16),
                     preferred_element_type=jnp.float32)    # (B*T, W*K)
    emb = jnp.dot(pooled.astype(jnp.bfloat16), fw_ref[...],
                  preferred_element_type=jnp.float32) + fb_ref[...]  # (B*T, D)

    # s2s Linear + SELU activation.
    hid = _selu(jnp.dot(emb.astype(jnp.bfloat16), sw_ref[...],
                        preferred_element_type=jnp.float32) + sb_ref[...])

    # Both heads fused into one lane-dense padded output slab.
    out_ref[...] = jnp.dot(hid.astype(jnp.bfloat16), hw_ref[...],
                           preferred_element_type=jnp.float32) + hb_ref[...]


# ------------------------------ host wrappers --------------------------------


def _build_kernel_operands(visual, params):
    """XLA-side (cheap) packing of frames + weights into MXU-friendly operands."""
    b, t, c, h, w = visual.shape
    n = b * t
    k = params["conv_w"].shape[-1]
    n_cont = params["cont_w"].shape[-1]
    n_cat = params["cat_w"].shape[-1]
    out_pad = 128 * pl.cdiv(n_cont + n_cat, 128)

    frames = visual.reshape(n, c, h, w).astype(jnp.float32)
    nhwc = jnp.transpose(frames, (0, 2, 3, 1))               # (N, H, W, C)
    xp = jnp.pad(nhwc, ((0, 0), (1, 1), (1, 1), (0, 0)))     # (N, H+2, W+2, C)

    # Row-triples: xcat[n*H + hh, kh*(W+2)*C + w2*C + cc] = xp[n, hh+kh, w2, cc]
    rowcat = jnp.concatenate(
        [xp[:, kh:kh + h, :, :].reshape(n, h, (w + 2) * c) for kh in range(3)],
        axis=-1)                                             # (N, H, 3*(W+2)*C)
    xcat = rowcat.reshape(n * h, 3 * (w + 2) * c)

    # Banded conv weight (3*(W+2)*C, W*K): column (w*K+k), row (kh,(w2,cc))
    # holds conv_w[kh, w2-w, cc, k] when 0 <= w2-w <= 2, else 0.
    conv_w = params["conv_w"].astype(jnp.float32)            # (3, 3, C, K)
    w2_idx = jnp.arange(w + 2)[:, None]
    w_idx = jnp.arange(w)[None, :]
    dw = w2_idx - w_idx                                      # (W+2, W)
    valid = (dw >= 0) & (dw <= 2)
    gathered = conv_w[:, jnp.clip(dw, 0, 2)]                 # (3, W+2, W, C, K)
    banded = jnp.where(valid[None, :, :, None, None], gathered, 0.0)
    conv_wfull = banded.transpose(0, 1, 3, 2, 4).reshape(3 * (w + 2) * c, w * k)
    conv_bfull = jnp.tile(params["conv_b"].astype(jnp.float32), (w,))[None, :]

    # GAP: selection matrix sums each frame's H rows, scaled by 1/(H*W);
    # the W-sum is folded into the W-tiled fc weight below.
    sel = jnp.repeat(jnp.eye(n, dtype=jnp.float32), h, axis=1) / float(h * w)
    fc_wfull = jnp.tile(params["fc_w"].astype(jnp.float32), (w, 1))
    fc_b = params["fc_b"].astype(jnp.float32)[None, :]

    s2s_w = params["s2s_w"].astype(jnp.float32)
    s2s_b = params["s2s_b"].astype(jnp.float32)[None, :]

    # Fused, zero-padded lane-dense head (VA columns first, then categorical).
    head_w = jnp.concatenate([params["cont_w"], params["cat_w"]], axis=1)
    head_w = jnp.pad(head_w.astype(jnp.float32),
                     ((0, 0), (0, out_pad - (n_cont + n_cat))))
    head_b = jnp.concatenate([params["cont_b"], params["cat_b"]], axis=0)
    head_b = jnp.pad(head_b.astype(jnp.float32),
                     (0, out_pad - (n_cont + n_cat)))[None, :]

    bf = lambda a: a.astype(jnp.bfloat16)
    operands = (bf(xcat), bf(conv_wfull), conv_bfull, bf(sel), bf(fc_wfull),
                fc_b, bf(s2s_w), s2s_b, bf(head_w), head_b)
    return operands, (n, out_pad, n_cont, n_cat)


def visual_network_forward(x, params):
    """x = (audio, visual); visual is NCHW per frame: (B, T, C, H, W)."""
    _audio, visual = x          # audio is unused by this (visual-only) module
    b, t, c, h, w = visual.shape
    operands, (n, out_pad, n_cont, n_cat) = _build_kernel_operands(visual, params)

    def full(shape):
        return pl.BlockSpec(shape, lambda i: (0,) * len(shape))

    out = pl.pallas_call(
        _fused_kernel,
        out_shape=jax.ShapeDtypeStruct((n, out_pad), jnp.float32),
        grid=(1,),
        in_specs=[full(op.shape) for op in operands],
        out_specs=full((n, out_pad)),
        compiler_params=pltpu.CompilerParams(
            dimension_semantics=("arbitrary",),
            vmem_limit_bytes=8 * 1024 * 1024),
    )(*operands)

    va = out[:, :n_cont].reshape(b, t, n_cont)
    cat = out[:, n_cont:n_cont + n_cat].reshape(b, t, n_cat)
    return {"VA": va, "discretized": cat}


# ------------------------------ reference (jnp) ------------------------------


def _reference_forward(x, params):
    _audio, visual = x
    b, t, c, h, w = visual.shape
    frames = visual.reshape(b * t, c, h, w).astype(jnp.float32)
    nhwc = jnp.transpose(frames, (0, 2, 3, 1))
    conv = lax.conv_general_dilated(
        nhwc, params["conv_w"].astype(jnp.float32),
        window_strides=(1, 1), padding="SAME",
        dimension_numbers=("NHWC", "HWIO", "NHWC"))
    act = _selu(conv + params["conv_b"])
    pooled = jnp.mean(act, axis=(1, 2))
    emb = pooled @ params["fc_w"] + params["fc_b"]
    hid = _selu(emb @ params["s2s_w"] + params["s2s_b"])
    out = hid @ params["cont_w"] + params["cont_b"]
    out_cat = hid @ params["cat_w"] + params["cat_b"]
    return {"VA": out.reshape(b, t, -1),
            "discretized": out_cat.reshape(b, t, -1)}


# ---------------------------------- main -------------------------------------

if __name__ == "__main__":
    B, T, C, H, W = 2, 4, 3, 16, 16        # visual frames, NCHW per frame
    K = 8                                  # conv channels in VisualConvEncoder
    D_EMB = 32                             # d_embedding
    D_HID = 32                             # s2s hidden size
    N_CONT = 2                             # 'VA' (valence/arousal)
    N_CAT = 4                              # discretized classes

    key = jax.random.PRNGKey(0)
    ks = jax.random.split(key, 10)
    params = {
        "conv_w": 0.1 * jax.random.normal(ks[0], (3, 3, C, K), jnp.float32),
        "conv_b": 0.1 * jax.random.normal(ks[1], (K,), jnp.float32),
        "fc_w":   0.1 * jax.random.normal(ks[2], (K, D_EMB), jnp.float32),
        "fc_b":   0.1 * jax.random.normal(ks[3], (D_EMB,), jnp.float32),
        "s2s_w":  0.1 * jax.random.normal(ks[4], (D_EMB, D_HID), jnp.float32),
        "s2s_b":  0.1 * jax.random.normal(ks[5], (D_HID,), jnp.float32),
        "cont_w": 0.1 * jax.random.normal(ks[6], (D_HID, N_CONT), jnp.float32),
        "cont_b": 0.1 * jax.random.normal(ks[7], (N_CONT,), jnp.float32),
        "cat_w":  0.1 * jax.random.normal(ks[8], (D_HID, N_CAT), jnp.float32),
        "cat_b":  0.1 * jax.random.normal(ks[9], (N_CAT,), jnp.float32),
    }

    audio = jax.random.normal(jax.random.PRNGKey(1), (B, T, 10), jnp.float32)
    visual = jax.random.normal(jax.random.PRNGKey(2), (B, T, C, H, W), jnp.float32)

    result = visual_network_forward((audio, visual), params)
    jax.block_until_ready(result)

    ref = _reference_forward((audio, visual), params)
    assert result["VA"].shape == (B, T, N_CONT)
    assert result["discretized"].shape == (B, T, N_CAT)
    # bf16 MXU operands (f32 accumulation) vs a pure-f32 reference.
    assert jnp.allclose(result["VA"], ref["VA"], rtol=2e-2, atol=2e-2)
    assert jnp.allclose(result["discretized"], ref["discretized"],
                        rtol=2e-2, atol=2e-2)

    print("KERNEL_OK")
</pallas_src>

<mosaic_0001>
module attributes {stable_mosaic.version = 11 : i64} {
  func.func @_fused_kernel(%arg0: i32, %arg1: memref<128x162xbf16, #tpu.memory_space<vmem>>, %arg2: memref<162x128xbf16, #tpu.memory_space<vmem>>, %arg3: memref<1x128xf32, #tpu.memory_space<vmem>>, %arg4: memref<8x128xbf16, #tpu.memory_space<vmem>>, %arg5: memref<128x32xbf16, #tpu.memory_space<vmem>>, %arg6: memref<1x32xf32, #tpu.memory_space<vmem>>, %arg7: memref<32x32xbf16, #tpu.memory_space<vmem>>, %arg8: memref<1x32xf32, #tpu.memory_space<vmem>>, %arg9: memref<32x128xbf16, #tpu.memory_space<vmem>>, %arg10: memref<1x128xf32, #tpu.memory_space<vmem>>, %arg11: memref<8x128xf32, #tpu.memory_space<vmem>>) attributes {dimension_semantics = [#tpu.dimension_semantics<arbitrary>], iteration_bounds = array<i64: 1>, scalar_prefetch = 0 : i64, scratch_operands = 0 : i64, tpu.core_type = #tpu.core_type<tc>, window_params = [{pipeline_mode = #tpu.pipeline_mode<synchronous>, transform_indices = @transform_0, window_bounds = array<i64: 128, 162>}, {pipeline_mode = #tpu.pipeline_mode<synchronous>, transform_indices = @transform_1, window_bounds = array<i64: 162, 128>}, {pipeline_mode = #tpu.pipeline_mode<synchronous>, transform_indices = @transform_2, window_bounds = array<i64: 1, 128>}, {pipeline_mode = #tpu.pipeline_mode<synchronous>, transform_indices = @transform_3, window_bounds = array<i64: 8, 128>}, {pipeline_mode = #tpu.pipeline_mode<synchronous>, transform_indices = @transform_4, window_bounds = array<i64: 128, 32>}, {pipeline_mode = #tpu.pipeline_mode<synchronous>, transform_indices = @transform_5, window_bounds = array<i64: 1, 32>}, {pipeline_mode = #tpu.pipeline_mode<synchronous>, transform_indices = @transform_6, window_bounds = array<i64: 32, 32>}, {pipeline_mode = #tpu.pipeline_mode<synchronous>, transform_indices = @transform_7, window_bounds = array<i64: 1, 32>}, {pipeline_mode = #tpu.pipeline_mode<synchronous>, transform_indices = @transform_8, window_bounds = array<i64: 32, 128>}, {pipeline_mode = #tpu.pipeline_mode<synchronous>, transform_indices = @transform_9, window_bounds = array<i64: 1, 128>}, {pipeline_mode = #tpu.pipeline_mode<synchronous>, transform_indices = @transform_10, window_bounds = array<i64: 8, 128>}]} {
    %c0 = arith.constant 0 : index
    %c0_0 = arith.constant 0 : index
    %0 = vector.load %arg1[%c0, %c0_0] : memref<128x162xbf16, #tpu.memory_space<vmem>>, vector<128x162xbf16>
    %c0_1 = arith.constant 0 : index
    %c0_2 = arith.constant 0 : index
    %1 = vector.load %arg2[%c0_1, %c0_2] : memref<162x128xbf16, #tpu.memory_space<vmem>>, vector<162x128xbf16>
    %cst = arith.constant dense<0.000000e+00> : vector<128x128xf32>
    %2 = tpu.matmul %0, %1, %cst {dimension_numbers = #tpu.dot_dimension_numbers<[1], [0], [0], [1], [0, 0, 1, 1], [], []>} : vector<128x162xbf16>, vector<162x128xbf16>, vector<128x128xf32> -> vector<128x128xf32>
    %c0_3 = arith.constant 0 : index
    %c0_4 = arith.constant 0 : index
    %3 = vector.load %arg3[%c0_3, %c0_4] : memref<1x128xf32, #tpu.memory_space<vmem>>, vector<1x128xf32>
    %4 = vector.broadcast %3 : vector<1x128xf32> to vector<128x128xf32>
    %5 = arith.addf %2, %4 : vector<128x128xf32>
    %cst_5 = arith.constant 0.000000e+00 : f32
    %6 = vector.broadcast %cst_5 : f32 to vector<128x128xf32>
    %7 = arith.cmpf ogt, %5, %6 : vector<128x128xf32>
    %cst_6 = arith.constant 0.000000e+00 : f32
    %8 = vector.broadcast %cst_6 : f32 to vector<128x128xf32>
    %9 = arith.minimumf %5, %8 : vector<128x128xf32>
    %10 = math.exp %9 : vector<128x128xf32>
    %cst_7 = arith.constant 1.000000e+00 : f32
    %11 = vector.broadcast %cst_7 : f32 to vector<128x128xf32>
    %12 = arith.subf %10, %11 : vector<128x128xf32>
    %cst_8 = arith.constant 1.67326319 : f32
    %13 = vector.broadcast %cst_8 : f32 to vector<128x128xf32>
    %14 = arith.mulf %13, %12 : vector<128x128xf32>
    %15 = arith.select %7, %5, %14 : vector<128x128xi1>, vector<128x128xf32>
    %cst_9 = arith.constant 1.05070102 : f32
    %16 = vector.broadcast %cst_9 : f32 to vector<128x128xf32>
    %17 = arith.mulf %16, %15 : vector<128x128xf32>
    %c0_10 = arith.constant 0 : index
    %c0_11 = arith.constant 0 : index
    %18 = vector.load %arg4[%c0_10, %c0_11] : memref<8x128xbf16, #tpu.memory_space<vmem>>, vector<8x128xbf16>
    %19 = arith.truncf %17 : vector<128x128xf32> to vector<128x128xbf16>
    %cst_12 = arith.constant dense<0.000000e+00> : vector<8x128xf32>
    %20 = tpu.matmul %18, %19, %cst_12 {dimension_numbers = #tpu.dot_dimension_numbers<[1], [0], [0], [1], [0, 0, 1, 1], [], []>} : vector<8x128xbf16>, vector<128x128xbf16>, vector<8x128xf32> -> vector<8x128xf32>
    %21 = arith.truncf %20 : vector<8x128xf32> to vector<8x128xbf16>
    %c0_13 = arith.constant 0 : index
    %c0_14 = arith.constant 0 : index
    %22 = vector.load %arg5[%c0_13, %c0_14] : memref<128x32xbf16, #tpu.memory_space<vmem>>, vector<128x32xbf16>
    %cst_15 = arith.constant dense<0.000000e+00> : vector<8x32xf32>
    %23 = tpu.matmul %21, %22, %cst_15 {dimension_numbers = #tpu.dot_dimension_numbers<[1], [0], [0], [1], [0, 0, 1, 1], [], []>} : vector<8x128xbf16>, vector<128x32xbf16>, vector<8x32xf32> -> vector<8x32xf32>
    %c0_16 = arith.constant 0 : index
    %c0_17 = arith.constant 0 : index
    %24 = vector.load %arg6[%c0_16, %c0_17] : memref<1x32xf32, #tpu.memory_space<vmem>>, vector<1x32xf32>
    %25 = vector.broadcast %24 : vector<1x32xf32> to vector<8x32xf32>
    %26 = arith.addf %23, %25 : vector<8x32xf32>
    %27 = arith.truncf %26 : vector<8x32xf32> to vector<8x32xbf16>
    %c0_18 = arith.constant 0 : index
    %c0_19 = arith.constant 0 : index
    %28 = vector.load %arg7[%c0_18, %c0_19] : memref<32x32xbf16, #tpu.memory_space<vmem>>, vector<32x32xbf16>
    %cst_20 = arith.constant dense<0.000000e+00> : vector<8x32xf32>
    %29 = tpu.matmul %27, %28, %cst_20 {dimension_numbers = #tpu.dot_dimension_numbers<[1], [0], [0], [1], [0, 0, 1, 1], [], []>} : vector<8x32xbf16>, vector<32x32xbf16>, vector<8x32xf32> -> vector<8x32xf32>
    %c0_21 = arith.constant 0 : index
    %c0_22 = arith.constant 0 : index
    %30 = vector.load %arg8[%c0_21, %c0_22] : memref<1x32xf32, #tpu.memory_space<vmem>>, vector<1x32xf32>
    %31 = vector.broadcast %30 : vector<1x32xf32> to vector<8x32xf32>
    %32 = arith.addf %29, %31 : vector<8x32xf32>
    %cst_23 = arith.constant 0.000000e+00 : f32
    %33 = vector.broadcast %cst_23 : f32 to vector<8x32xf32>
    %34 = arith.cmpf ogt, %32, %33 : vector<8x32xf32>
    %cst_24 = arith.constant 0.000000e+00 : f32
    %35 = vector.broadcast %cst_24 : f32 to vector<8x32xf32>
    %36 = arith.minimumf %32, %35 : vector<8x32xf32>
    %37 = math.exp %36 : vector<8x32xf32>
    %cst_25 = arith.constant 1.000000e+00 : f32
    %38 = vector.broadcast %cst_25 : f32 to vector<8x32xf32>
    %39 = arith.subf %37, %38 : vector<8x32xf32>
    %cst_26 = arith.constant 1.67326319 : f32
    %40 = vector.broadcast %cst_26 : f32 to vector<8x32xf32>
    %41 = arith.mulf %40, %39 : vector<8x32xf32>
    %42 = arith.select %34, %32, %41 : vector<8x32xi1>, vector<8x32xf32>
    %cst_27 = arith.constant 1.05070102 : f32
    %43 = vector.broadcast %cst_27 : f32 to vector<8x32xf32>
    %44 = arith.mulf %43, %42 : vector<8x32xf32>
    %45 = arith.truncf %44 : vector<8x32xf32> to vector<8x32xbf16>
    %c0_28 = arith.constant 0 : index
    %c0_29 = arith.constant 0 : index
    %46 = vector.load %arg9[%c0_28, %c0_29] : memref<32x128xbf16, #tpu.memory_space<vmem>>, vector<32x128xbf16>
    %cst_30 = arith.constant dense<0.000000e+00> : vector<8x128xf32>
    %47 = tpu.matmul %45, %46, %cst_30 {dimension_numbers = #tpu.dot_dimension_numbers<[1], [0], [0], [1], [0, 0, 1, 1], [], []>} : vector<8x32xbf16>, vector<32x128xbf16>, vector<8x128xf32> -> vector<8x128xf32>
    %c0_31 = arith.constant 0 : index
    %c0_32 = arith.constant 0 : index
    %48 = vector.load %arg10[%c0_31, %c0_32] : memref<1x128xf32, #tpu.memory_space<vmem>>, vector<1x128xf32>
    %49 = vector.broadcast %48 : vector<1x128xf32> to vector<8x128xf32>
    %50 = arith.addf %47, %49 : vector<8x128xf32>
    %c0_33 = arith.constant 0 : index
    %c0_34 = arith.constant 0 : index
    %51 = vector.load %arg11[%c0_33, %c0_34] : memref<8x128xf32, #tpu.memory_space<vmem>>, vector<8x128xf32>
    tpu.vector_store %arg11[%c0_33, %c0_34], %50 {strides = array<i32>} : memref<8x128xf32, #tpu.memory_space<vmem>>, vector<8x128xf32>,
    return
  }
  func.func @transform_0(%arg0: i32) -> (i32, i32) {
    %c0_i32 = arith.constant 0 : i32
    %c0_i32_0 = arith.constant 0 : i32
    %c0_i32_1 = arith.constant 0 : i32
    return %c0_i32, %c0_i32_0 : i32, i32
  }
  func.func @transform_1(%arg0: i32) -> (i32, i32) {
    %c0_i32 = arith.constant 0 : i32
    %c0_i32_0 = arith.constant 0 : i32
    %c0_i32_1 = arith.constant 0 : i32
    return %c0_i32, %c0_i32_0 : i32, i32
  }
  func.func @transform_2(%arg0: i32) -> (i32, i32) {
    %c0_i32 = arith.constant 0 : i32
    %c0_i32_0 = arith.constant 0 : i32
    %c0_i32_1 = arith.constant 0 : i32
    return %c0_i32, %c0_i32_0 : i32, i32
  }
  func.func @transform_3(%arg0: i32) -> (i32, i32) {
    %c0_i32 = arith.constant 0 : i32
    %c0_i32_0 = arith.constant 0 : i32
    %c0_i32_1 = arith.constant 0 : i32
    return %c0_i32, %c0_i32_0 : i32, i32
  }
  func.func @transform_4(%arg0: i32) -> (i32, i32) {
    %c0_i32 = arith.constant 0 : i32
    %c0_i32_0 = arith.constant 0 : i32
    %c0_i32_1 = arith.constant 0 : i32
    return %c0_i32, %c0_i32_0 : i32, i32
  }
  func.func @transform_5(%arg0: i32) -> (i32, i32) {
    %c0_i32 = arith.constant 0 : i32
    %c0_i32_0 = arith.constant 0 : i32
    %c0_i32_1 = arith.constant 0 : i32
    return %c0_i32, %c0_i32_0 : i32, i32
  }
  func.func @transform_6(%arg0: i32) -> (i32, i32) {
    %c0_i32 = arith.constant 0 : i32
    %c0_i32_0 = arith.constant 0 : i32
    %c0_i32_1 = arith.constant 0 : i32
    return %c0_i32, %c0_i32_0 : i32, i32
  }
  func.func @transform_7(%arg0: i32) -> (i32, i32) {
    %c0_i32 = arith.constant 0 : i32
    %c0_i32_0 = arith.constant 0 : i32
    %c0_i32_1 = arith.constant 0 : i32
    return %c0_i32, %c0_i32_0 : i32, i32
  }
  func.func @transform_8(%arg0: i32) -> (i32, i32) {
    %c0_i32 = arith.constant 0 : i32
    %c0_i32_0 = arith.constant 0 : i32
    %c0_i32_1 = arith.constant 0 : i32
    return %c0_i32, %c0_i32_0 : i32, i32
  }
  func.func @transform_9(%arg0: i32) -> (i32, i32) {
    %c0_i32 = arith.constant 0 : i32
    %c0_i32_0 = arith.constant 0 : i32
    %c0_i32_1 = arith.constant 0 : i32
    return %c0_i32, %c0_i32_0 : i32, i32
  }
  func.func @transform_10(%arg0: i32) -> (i32, i32) {
    %c0_i32 = arith.constant 0 : i32
    %c0_i32_0 = arith.constant 0 : i32
    %c0_i32_1 = arith.constant 0 : i32
    return %c0_i32, %c0_i32_0 : i32, i32
  }
}

</mosaic_0001>

<llo_original>
// kernel: tpu_custom_call.1
$region0: #{tpu_custom_call.1}
  #allocation0 [shape = 'u32[]', space=smem, size = 0x4, offset = 0x4, fixed_abs, tag = 'smem constant byte address 0x4 - core index']
  #allocation1 [shape = 'u32[144,128]{1,0:T(1,128)}', space=vmem, size = 0x12000, scoped, tag = 'internal scratch']
  %s0 = inlined_call_operand.vmem [shape: bf16[128,162], index: 0, kind: input, shape index: {}]
  %s1 = inlined_call_operand.vmem [shape: bf16[162,128], index: 1, kind: input, shape index: {}]
  %s2 = inlined_call_operand.vmem [shape: f32[1,128], index: 2, kind: input, shape index: {}]
  %s3 = inlined_call_operand.vmem [shape: bf16[8,128], index: 3, kind: input, shape index: {}]
  %s4 = inlined_call_operand.vmem [shape: bf16[128,32], index: 4, kind: input, shape index: {}]
  %s5 = inlined_call_operand.vmem [shape: f32[1,32], index: 5, kind: input, shape index: {}]
  %s6 = inlined_call_operand.vmem [shape: bf16[32,32], index: 6, kind: input, shape index: {}]
  %s7 = inlined_call_operand.vmem [shape: f32[1,32], index: 7, kind: input, shape index: {}]
  %s8 = inlined_call_operand.vmem [shape: bf16[32,128], index: 8, kind: input, shape index: {}]
  %s9 = inlined_call_operand.vmem [shape: f32[1,128], index: 9, kind: input, shape index: {}]
  %s10 = inlined_call_operand.hbm [shape: f32[8,128], index: 10, kind: output, shape index: {}]
  %s11 = sld [smem:[#allocation0]]
  $region50: #{tpu_custom_call.1} parent=0
    _
  %s13 = ssub.s32 1, %s11
  %s14 = scalar_select 0, %s13, %s11
  $region1: #{tpu_custom_call.1} parent=0
    #allocation2 [shape = 'u8[4096]{0}', space=vmem, size = 0x1000, scoped, tag = 'output window, operand 0, single buffered']
    #allocation3 [shape = 's32[1]{0}', space=sflag, size = 0x4, scoped, tag = 'scoped memory for tpu_custom_call.1']
    %15 = vsyncpa [#allocation3], 0
    // Predicated region
    $region2: #{tpu_custom_call.1} parent=1 // pred_check
      _
    $region3: #{tpu_custom_call.1} parent=1 // pred_check_branch
      %17 = sbr.rel (0) target = $region5
    $region4: #{tpu_custom_call.1} parent=1 // pred_region
      _
    $region5: #{tpu_custom_call.1} parent=1 // pred_fallthru
      _
    // Predicated region
    $region6: #{tpu_custom_call.1} parent=1 // pred_check
      _
    $region7: #{tpu_custom_call.1} parent=1 // pred_check_branch
      %19 = sbr.rel (0) target = $region9
    $region8: #{tpu_custom_call.1} parent=1 // pred_region
      _
    $region9: #{tpu_custom_call.1} parent=1 // pred_fallthru
      _
    // Predicated region
    $region10: #{tpu_custom_call.1} parent=1 // pred_check
      _
    $region11: #{tpu_custom_call.1} parent=1 // pred_check_branch
      %21 = sbr.rel (0) target = $region13
    $region12: #{tpu_custom_call.1} parent=1 // pred_region
      _
    $region13: #{tpu_custom_call.1} parent=1 // pred_fallthru
      _
    // Predicated region
    $region14: #{tpu_custom_call.1} parent=1 // pred_check
      _
    $region15: #{tpu_custom_call.1} parent=1 // pred_check_branch
      %23 = sbr.rel (0) target = $region17
    $region16: #{tpu_custom_call.1} parent=1 // pred_region
      _
    $region17: #{tpu_custom_call.1} parent=1 // pred_fallthru
      _
    // Predicated region
    $region18: #{tpu_custom_call.1} parent=1 // pred_check
      _
    $region19: #{tpu_custom_call.1} parent=1 // pred_check_branch
      %25 = sbr.rel (0) target = $region21
    $region20: #{tpu_custom_call.1} parent=1 // pred_region
      _
    $region21: #{tpu_custom_call.1} parent=1 // pred_fallthru
      _
    // Predicated region
    $region22: #{tpu_custom_call.1} parent=1 // pred_check
      _
    $region23: #{tpu_custom_call.1} parent=1 // pred_check_branch
      %27 = sbr.rel (0) target = $region25
    $region24: #{tpu_custom_call.1} parent=1 // pred_region
      _
    $region25: #{tpu_custom_call.1} parent=1 // pred_fallthru
      _
    // Predicated region
    $region26: #{tpu_custom_call.1} parent=1 // pred_check
      _
    $region27: #{tpu_custom_call.1} parent=1 // pred_check_branch
      %29 = sbr.rel (0) target = $region29
    $region28: #{tpu_custom_call.1} parent=1 // pred_region
      _
    $region29: #{tpu_custom_call.1} parent=1 // pred_fallthru
      _
    // Predicated region
    $region30: #{tpu_custom_call.1} parent=1 // pred_check
      _
    $region31: #{tpu_custom_call.1} parent=1 // pred_check_branch
      %31 = sbr.rel (0) target = $region33
    $region32: #{tpu_custom_call.1} parent=1 // pred_region
      _
    $region33: #{tpu_custom_call.1} parent=1 // pred_fallthru
      _
    // Predicated region
    $region34: #{tpu_custom_call.1} parent=1 // pred_check
      _
    $region35: #{tpu_custom_call.1} parent=1 // pred_check_branch
      %33 = sbr.rel (0) target = $region37
    $region36: #{tpu_custom_call.1} parent=1 // pred_region
      _
    $region37: #{tpu_custom_call.1} parent=1 // pred_fallthru
      _
    // Predicated region
    $region38: #{tpu_custom_call.1} parent=1 // pred_check
      _
    $region39: #{tpu_custom_call.1} parent=1 // pred_check_branch
      %35 = sbr.rel (0) target = $region41
    $region40: #{tpu_custom_call.1} parent=1 // pred_region
      _
    $region41: #{tpu_custom_call.1} parent=1 // pred_fallthru
      _
    %v37 = vld [vmem:[%s0] sm:$0xff]
    %v38 = vld [vmem:[%s0 + $0x8] sm:$0xff]
    %v39 = vld [vmem:[%s0 + $0x10] sm:$0xff]
    %v40 = vld [vmem:[%s0 + $0x18] sm:$0xff]
    %v41 = vld [vmem:[%s0 + $0x20] sm:$0xff]
    %v42 = vld [vmem:[%s0 + $0x28] sm:$0xff]
    %v43 = vld [vmem:[%s0 + $0x30] sm:$0xff]
    %v44 = vld [vmem:[%s0 + $0x38] sm:$0xff]
    %v45 = vld [vmem:[%s0 + $0x40] sm:$0xff]
    %v46 = vld [vmem:[%s0 + $0x48] sm:$0xff]
    %v47 = vld [vmem:[%s0 + $0x50] sm:$0xff]
    %v48 = vld [vmem:[%s0 + $0x58] sm:$0xff]
    %v49 = vld [vmem:[%s0 + $0x60] sm:$0xff]
    %v50 = vld [vmem:[%s0 + $0x68] sm:$0xff]
    %v51 = vld [vmem:[%s0 + $0x70] sm:$0xff]
    %v52 = vld [vmem:[%s0 + $0x78] sm:$0xff]
    %v53 = vld [vmem:[%s1] sm:$0xf]
    %v54 = vld [vmem:[%s1 + $0x4] sm:$0xf]
    %v55 = vld [vmem:[%s1 + $0x8] sm:$0xf]
    %v56 = vld [vmem:[%s1 + $0xc] sm:$0xf]
    %v57 = vld [vmem:[%s1 + $0x10] sm:$0xf]
    %v58 = vld [vmem:[%s1 + $0x14] sm:$0xf]
    %v59 = vld [vmem:[%s1 + $0x18] sm:$0xf]
    %v60 = vld [vmem:[%s1 + $0x1c] sm:$0xf]
    %v61 = vld [vmem:[%s1 + $0x20] sm:$0xf]
    %v62 = vld [vmem:[%s1 + $0x24] sm:$0xf]
    %v63 = vld [vmem:[%s1 + $0x28] sm:$0xf]
    %v64 = vld [vmem:[%s1 + $0x2c] sm:$0xf]
    %v65 = vld [vmem:[%s1 + $0x30] sm:$0xf]
    %v66 = vld [vmem:[%s1 + $0x34] sm:$0xf]
    %v67 = vld [vmem:[%s1 + $0x38] sm:$0xf]
    %v68 = vld [vmem:[%s1 + $0x3c] sm:$0xf]
    %v69 = vld [vmem:[%s1 + $0x40] sm:$0xf]
    %v70 = vld [vmem:[%s1 + $0x44] sm:$0xf]
    %v71 = vld [vmem:[%s1 + $0x48] sm:$0xf]
    %v72 = vld [vmem:[%s1 + $0x4c] sm:$0xf]
    %v73 = vld [vmem:[%s1 + $0x50] sm:$0x1]
    %v74 = vld [vmem:[%s2] sm:$0x1]
    %v76 = vlaneseq
    %v77 = vshrl.u32 %v76, 7
    %v78 = vsub.s32 0, %v77
    %v79 = vrot.slane %v74, %v78
    %v97 = vunpack.c.l.b16 %v37
    %v98 = vunpack.c.h.b16 %v37
    %v99 = vunpack.c.l.b16 %v38
    %v100 = vunpack.c.h.b16 %v38
    %v101 = vunpack.c.l.b16 %v39
    %v102 = vunpack.c.h.b16 %v39
    %v103 = vunpack.c.l.b16 %v40
    %v104 = vunpack.c.h.b16 %v40
    %v105 = vunpack.c.l.b16 %v41
    %v106 = vunpack.c.h.b16 %v41
    %v107 = vunpack.c.l.b16 %v42
    %v108 = vunpack.c.h.b16 %v42
    %v109 = vunpack.c.l.b16 %v43
    %v110 = vunpack.c.h.b16 %v43
    %v111 = vunpack.c.l.b16 %v44
    %v112 = vunpack.c.h.b16 %v44
    %v113 = vunpack.c.l.b16 %v45
    %v114 = vunpack.c.h.b16 %v45
    %v115 = vunpack.c.l.b16 %v46
    %v116 = vunpack.c.h.b16 %v46
    %v117 = vunpack.c.l.b16 %v47
    %v118 = vunpack.c.h.b16 %v47
    %v119 = vunpack.c.l.b16 %v48
    %v120 = vunpack.c.h.b16 %v48
    %v121 = vunpack.c.l.b16 %v49
    %v122 = vunpack.c.h.b16 %v49
    %v123 = vunpack.c.l.b16 %v50
    %v124 = vunpack.c.h.b16 %v50
    %v125 = vunpack.c.l.b16 %v51
    %v126 = vunpack.c.h.b16 %v51
    %v127 = vunpack.c.l.b16 %v52
    %v128 = vunpack.c.h.b16 %v52
    %v129 = vpack.c.b16 %v99, %v97
    %v130 = vpack.c.b16 %v100, %v98
    %v131 = vpack.c.b16 %v103, %v101
    %v132 = vpack.c.b16 %v104, %v102
    %v133 = vpack.c.b16 %v107, %v105
    %v134 = vpack.c.b16 %v108, %v106
    %v135 = vpack.c.b16 %v111, %v109
    %v136 = vpack.c.b16 %v112, %v110
    %v137 = vpack.c.b16 %v115, %v113
    %v138 = vpack.c.b16 %v116, %v114
    %v139 = vpack.c.b16 %v119, %v117
    %v140 = vpack.c.b16 %v120, %v118
    %v141 = vpack.c.b16 %v123, %v121
    %v142 = vpack.c.b16 %v124, %v122
    %v143 = vpack.c.b16 %v127, %v125
    %v144 = vpack.c.b16 %v128, %v126
    %v174 = vunpack.c.l.b16 %v53
    %v175 = vunpack.c.l.b16 %v54
    %v176 = vunpack.c.l.b16 %v55
    %v177 = vunpack.c.l.b16 %v56
    %v178 = vunpack.c.l.b16 %v57
    %v179 = vunpack.c.l.b16 %v58
    %v180 = vunpack.c.l.b16 %v59
    %v181 = vunpack.c.l.b16 %v60
    %v182 = vunpack.c.l.b16 %v61
    %v183 = vunpack.c.l.b16 %v62
    %v184 = vunpack.c.l.b16 %v63
    %v185 = vunpack.c.l.b16 %v64
    %v186 = vunpack.c.l.b16 %v65
    %v187 = vunpack.c.l.b16 %v66
    %v188 = vunpack.c.l.b16 %v67
    %v189 = vunpack.c.l.b16 %v68
    %v190 = vunpack.c.l.b16 %v69
    %v191 = vunpack.c.l.b16 %v70
    %v192 = vunpack.c.l.b16 %v71
    %v193 = vunpack.c.l.b16 %v72
    %v194 = vunpack.c.l.b16 %v73
    %v195 = vpack.c.b16 %v175, %v174
    %v196 = vpack.c.b16 %v177, %v176
    %v197 = vpack.c.b16 %v179, %v178
    %v198 = vpack.c.b16 %v181, %v180
    %v199 = vpack.c.b16 %v183, %v182
    %v200 = vpack.c.b16 %v185, %v184
    %v201 = vpack.c.b16 %v187, %v186
    %v202 = vpack.c.b16 %v189, %v188
    %v203 = vpack.c.b16 %v191, %v190
    %v204 = vpack.c.b16 %v193, %v192
    %v205 = vpack.c.b16 %v194, %v194
    %vm216 = vcmask 277504
    %v218 = vsel %vm216, %v130, 0
    %v221 = vsel %vm216, %v132, 0
    %v224 = vsel %vm216, %v134, 0
    %v227 = vsel %vm216, %v136, 0
    %v230 = vsel %vm216, %v138, 0
    %v233 = vsel %vm216, %v140, 0
    %v236 = vsel %vm216, %v142, 0
    %v239 = vsel %vm216, %v144, 0
    %vm241 = vcmask 1040384
    %v243 = vsel %vm241, %v205, 0
    %245 = vmatprep.subr.bf16.mxu0 0
    %246 = vmatpush1.bf16.msra.mxu0 %v195
    %247 = vmatprep.subr.bf16.mxu0 0
    %248 = vmatpush1.bf16.msra.mxu0 %v196
    %249 = vmatprep.subr.bf16.mxu0 0
    %250 = vmatpush1.bf16.msra.mxu0 %v197
    %251 = vmatprep.subr.bf16.mxu0 0
    %252 = vmatpush1.bf16.msra.mxu0 %v198
    %253 = vmatprep.subr.bf16.mxu0 0
    %254 = vmatpush1.bf16.msra.mxu0 %v199
    %255 = vmatprep.subr.bf16.mxu0 0
    %256 = vmatpush1.bf16.msra.mxu0 %v200
    %257 = vmatprep.subr.bf16.mxu0 0
    %258 = vmatpush1.bf16.msra.mxu0 %v201
    %259 = vmatprep.subr.bf16.mxu0 0
    %260 = vmatpush1.bf16.msra.mxu0 %v202
    %261 = vmatprep.subr.bf16.mxu0 0
    %262 = vmatpush1.bf16.msra.mxu0 %v203
    %263 = vmatprep.subr.bf16.mxu0 0
    %264 = vmatpush1.bf16.msra.mxu0 %v204
    %265 = vmatprep.subr.bf16.mxu0 0
    %266 = vmatpush1.bf16.msra.mxu0 %v243
    %267 = vmatprep.subr.bf16.mxu0 0
    %268 = vmatpush1.bf16.msra.mxu0 0
    %269 = vmatprep.subr.bf16.mxu0 0
    %270 = vmatpush1.bf16.msra.mxu0 0
    %271 = vmatprep.subr.bf16.mxu0 0
    %272 = vmatpush1.bf16.msra.mxu0 0
    %273 = vmatprep.subr.bf16.mxu0 0
    %274 = vmatpush1.bf16.msra.mxu0 0
    %275 = vmatprep.subr.bf16.mxu0 0
    %276 = vmatpush1.bf16.msra.mxu0 0
    %277 = vmatprep.mubr.bf16.mxu0 %v218
    %278 = vmatmul.mubr.bf16.gmra.mrb[0].mxu0 %v129
    %v279 = vpop.f32.mrb[0].mxu0
    %v280 = vadd.f32 %v79, %v279
    %v281 = vpop.f32.mrb[0].mxu0
    %v282 = vpop.f32.mrb[0].mxu0
    %v283 = vadd.f32 %v79, %v282
    %v284 = vpop.f32.mrb[0].mxu0
    %285 = vmatprep.mubr.bf16.mxu0 %v221
    %286 = vmatmul.mubr.bf16.gmra.mrb[0].mxu0 %v131
    %v287 = vpop.f32.mrb[0].mxu0
    %v288 = vadd.f32 %v79, %v287
    %v289 = vpop.f32.mrb[0].mxu0
    %v290 = vpop.f32.mrb[0].mxu0
    %v291 = vadd.f32 %v79, %v290
    %v292 = vpop.f32.mrb[0].mxu0
    %293 = vmatprep.mubr.bf16.mxu0 %v224
    %294 = vmatmul.mubr.bf16.gmra.mrb[0].mxu0 %v133
    %v295 = vpop.f32.mrb[0].mxu0
    %v296 = vadd.f32 %v79, %v295
    %v297 = vpop.f32.mrb[0].mxu0
    %v298 = vpop.f32.mrb[0].mxu0
    %v299 = vadd.f32 %v79, %v298
    %v300 = vpop.f32.mrb[0].mxu0
    %301 = vmatprep.mubr.bf16.mxu0 %v227
    %302 = vmatmul.mubr.bf16.gmra.mrb[0].mxu0 %v135
    %v303 = vpop.f32.mrb[0].mxu0
    %v304 = vadd.f32 %v79, %v303
    %v305 = vpop.f32.mrb[0].mxu0
    %v306 = vpop.f32.mrb[0].mxu0
    %v307 = vadd.f32 %v79, %v306
    %v308 = vpop.f32.mrb[0].mxu0
    %309 = vmatprep.mubr.bf16.mxu0 %v230
    %310 = vmatmul.mubr.bf16.gmra.mrb[0].mxu0 %v137
    %v311 = vpop.f32.mrb[0].mxu0
    %v312 = vadd.f32 %v79, %v311
    %v313 = vpop.f32.mrb[0].mxu0
    %v314 = vpop.f32.mrb[0].mxu0
    %v315 = vadd.f32 %v79, %v314
    %v316 = vpop.f32.mrb[0].mxu0
    %317 = vmatprep.mubr.bf16.mxu0 %v233
    %318 = vmatmul.mubr.bf16.gmra.mrb[0].mxu0 %v139
    %v319 = vpop.f32.mrb[0].mxu0
    %v320 = vadd.f32 %v79, %v319
    %v321 = vpop.f32.mrb[0].mxu0
    %v322 = vpop.f32.mrb[0].mxu0
    %v323 = vadd.f32 %v79, %v322
    %v324 = vpop.f32.mrb[0].mxu0
    %325 = vmatprep.mubr.bf16.mxu0 %v236
    %326 = vmatmul.mubr.bf16.gmra.mrb[0].mxu0 %v141
    %v327 = vpop.f32.mrb[0].mxu0
    %v328 = vadd.f32 %v79, %v327
    %v329 = vpop.f32.mrb[0].mxu0
    %v330 = vpop.f32.mrb[0].mxu0
    %v331 = vadd.f32 %v79, %v330
    %v332 = vpop.f32.mrb[0].mxu0
    %333 = vmatprep.mubr.bf16.mxu0 %v239
    %334 = vmatmul.mubr.bf16.gmra.mrb[0].mxu0 %v143
    %v335 = vpop.f32.mrb[0].mxu0
    %v336 = vadd.f32 %v79, %v335
    %v337 = vpop.f32.mrb[0].mxu0
    %v338 = vpop.f32.mrb[0].mxu0
    %v339 = vadd.f32 %v79, %v338
    %v340 = vpop.f32.mrb[0].mxu0
    %341 = vdwg.mxu0
    %vm342 = vcmp.gt.f32.partialorder %v280, 0.0
    %vm343 = vcmp.gt.f32.partialorder %v283, 0.0
    %vm344 = vcmp.gt.f32.partialorder %v288, 0.0
    %vm345 = vcmp.gt.f32.partialorder %v291, 0.0
    %vm346 = vcmp.gt.f32.partialorder %v296, 0.0
    %vm347 = vcmp.gt.f32.partialorder %v299, 0.0
    %vm348 = vcmp.gt.f32.partialorder %v304, 0.0
    %vm349 = vcmp.gt.f32.partialorder %v307, 0.0
    %vm350 = vcmp.gt.f32.partialorder %v312, 0.0
    %vm351 = vcmp.gt.f32.partialorder %v315, 0.0
    %vm352 = vcmp.gt.f32.partialorder %v320, 0.0
    %vm353 = vcmp.gt.f32.partialorder %v323, 0.0
    %vm354 = vcmp.gt.f32.partialorder %v328, 0.0
    %vm355 = vcmp.gt.f32.partialorder %v331, 0.0
    %vm356 = vcmp.gt.f32.partialorder %v336, 0.0
    %vm357 = vcmp.gt.f32.partialorder %v339, 0.0
    %v358 = vmin.f32 %v280, 0.0
    %v359 = vmin.f32 %v283, 0.0
    %v360 = vmin.f32 %v288, 0.0
    %v361 = vmin.f32 %v291, 0.0
    %v362 = vmin.f32 %v296, 0.0
    %v363 = vmin.f32 %v299, 0.0
    %v364 = vmin.f32 %v304, 0.0
    %v365 = vmin.f32 %v307, 0.0
    %v366 = vmin.f32 %v312, 0.0
    %v367 = vmin.f32 %v315, 0.0
    %v368 = vmin.f32 %v320, 0.0
    %v369 = vmin.f32 %v323, 0.0
    %v370 = vmin.f32 %v328, 0.0
    %v371 = vmin.f32 %v331, 0.0
    %v372 = vmin.f32 %v336, 0.0
    %v373 = vmin.f32 %v339, 0.0
    %v374 = vmul.f32 %v358, 1.442695
    %v375 = vpow.pop %v374
    %v376 = vmul.f32 %v359, 1.442695
    %v377 = vpow.pop %v376
    %v378 = vmul.f32 %v360, 1.442695
    %v379 = vpow.pop %v378
    %v380 = vmul.f32 %v361, 1.442695
    %v381 = vpow.pop %v380
    %v382 = vmul.f32 %v362, 1.442695
    %v383 = vpow.pop %v382
    %v384 = vmul.f32 %v363, 1.442695
    %v385 = vpow.pop %v384
    %v386 = vmul.f32 %v364, 1.442695
    %v387 = vpow.pop %v386
    %v388 = vmul.f32 %v365, 1.442695
    %v389 = vpow.pop %v388
    %v390 = vmul.f32 %v366, 1.442695
    %v391 = vpow.pop %v390
    %v392 = vmul.f32 %v367, 1.442695
    %v393 = vpow.pop %v392
    %v394 = vmul.f32 %v368, 1.442695
    %v395 = vpow.pop %v394
    %v396 = vmul.f32 %v369, 1.442695
    %v397 = vpow.pop %v396
    %v398 = vmul.f32 %v370, 1.442695
    %v399 = vpow.pop %v398
    %v400 = vmul.f32 %v371, 1.442695
    %v401 = vpow.pop %v400
    %v402 = vmul.f32 %v372, 1.442695
    %v403 = vpow.pop %v402
    %v404 = vmul.f32 %v373, 1.442695
    %v405 = vpow.pop %v404
    %v406 = vsub.f32 %v375, 1.0
    %v407 = vsub.f32 %v377, 1.0
    %v408 = vsub.f32 %v379, 1.0
    %v409 = vsub.f32 %v381, 1.0
    %v410 = vsub.f32 %v383, 1.0
    %v411 = vsub.f32 %v385, 1.0
    %v412 = vsub.f32 %v387, 1.0
    %v413 = vsub.f32 %v389, 1.0
    %v414 = vsub.f32 %v391, 1.0
    %v415 = vsub.f32 %v393, 1.0
    %v416 = vsub.f32 %v395, 1.0
    %v417 = vsub.f32 %v397, 1.0
    %v418 = vsub.f32 %v399, 1.0
    %v419 = vsub.f32 %v401, 1.0
    %v420 = vsub.f32 %v403, 1.0
    %v421 = vsub.f32 %v405, 1.0
    %v422 = vmul.f32 %v406, 1.6732632
    %v423 = vmul.f32 %v407, 1.6732632
    %v424 = vmul.f32 %v408, 1.6732632
    %v425 = vmul.f32 %v409, 1.6732632
    %v426 = vmul.f32 %v410, 1.6732632
    %v427 = vmul.f32 %v411, 1.6732632
    %v428 = vmul.f32 %v412, 1.6732632
    %v429 = vmul.f32 %v413, 1.6732632
    %v430 = vmul.f32 %v414, 1.6732632
    %v431 = vmul.f32 %v415, 1.6732632
    %v432 = vmul.f32 %v416, 1.6732632
    %v433 = vmul.f32 %v417, 1.6732632
    %v434 = vmul.f32 %v418, 1.6732632
    %v435 = vmul.f32 %v419, 1.6732632
    %v436 = vmul.f32 %v420, 1.6732632
    %v437 = vmul.f32 %v421, 1.6732632
    %v438 = vsel %vm342, %v280, %v422
    %v439 = vsel %vm343, %v283, %v423
    %v440 = vsel %vm344, %v288, %v424
    %v441 = vsel %vm345, %v291, %v425
    %v442 = vsel %vm346, %v296, %v426
    %v443 = vsel %vm347, %v299, %v427
    %v444 = vsel %vm348, %v304, %v428
    %v445 = vsel %vm349, %v307, %v429
    %v446 = vsel %vm350, %v312, %v430
    %v447 = vsel %vm351, %v315, %v431
    %v448 = vsel %vm352, %v320, %v432
    %v449 = vsel %vm353, %v323, %v433
    %v450 = vsel %vm354, %v328, %v434
    %v451 = vsel %vm355, %v331, %v435
    %v452 = vsel %vm356, %v336, %v436
    %v453 = vsel %vm357, %v339, %v437
    %v454 = vmul.f32 %v438, 1.050701
    %v455 = vmul.f32 %v439, 1.050701
    %v456 = vmul.f32 %v440, 1.050701
    %v457 = vmul.f32 %v441, 1.050701
    %v458 = vmul.f32 %v442, 1.050701
    %v459 = vmul.f32 %v443, 1.050701
    %v460 = vmul.f32 %v444, 1.050701
    %v461 = vmul.f32 %v445, 1.050701
    %v462 = vmul.f32 %v446, 1.050701
    %v463 = vmul.f32 %v447, 1.050701
    %v464 = vmul.f32 %v448, 1.050701
    %v465 = vmul.f32 %v449, 1.050701
    %v466 = vmul.f32 %v450, 1.050701
    %v467 = vmul.f32 %v451, 1.050701
    %v468 = vmul.f32 %v452, 1.050701
    %v469 = vmul.f32 %v453, 1.050701
    %v470 = vld [vmem:[%s3] sm:$0xf]
    %v471 = vpack.c.bf16 %v455, %v454
    %v472 = vpack.c.bf16 %v457, %v456
    %v473 = vpack.c.bf16 %v459, %v458
    %v474 = vpack.c.bf16 %v461, %v460
    %v475 = vpack.c.bf16 %v463, %v462
    %v476 = vpack.c.bf16 %v465, %v464
    %v477 = vpack.c.bf16 %v467, %v466
    %v478 = vpack.c.bf16 %v469, %v468
    %479 = vmatprep.subr.bf16.mxu0 0
    %480 = vmatpush1.bf16.msra.mxu0 %v471
    %481 = vmatprep.subr.bf16.mxu0 0
    %482 = vmatpush1.bf16.msra.mxu0 %v472
    %483 = vmatprep.subr.bf16.mxu0 0
    %484 = vmatpush1.bf16.msra.mxu0 %v473
    %485 = vmatprep.subr.bf16.mxu0 0
    %486 = vmatpush1.bf16.msra.mxu0 %v474
    %487 = vmatprep.subr.bf16.mxu0 0
    %488 = vmatpush1.bf16.msra.mxu0 %v475
    %489 = vmatprep.subr.bf16.mxu0 0
    %490 = vmatpush1.bf16.msra.mxu0 %v476
    %491 = vmatprep.subr.bf16.mxu0 0
    %492 = vmatpush1.bf16.msra.mxu0 %v477
    %493 = vmatprep.subr.bf16.mxu0 0
    %494 = vmatpush1.bf16.msra.mxu0 %v478
    %495 = vmatprep.subr.bf16.mxu0 0
    %496 = vmatpush1.bf16.msra.mxu0 0
    %497 = vmatprep.subr.bf16.mxu0 0
    %498 = vmatpush1.bf16.msra.mxu0 0
    %499 = vmatprep.subr.bf16.mxu0 0
    %500 = vmatpush1.bf16.msra.mxu0 0
    %501 = vmatprep.subr.bf16.mxu0 0
    %502 = vmatpush1.bf16.msra.mxu0 0
    %503 = vmatprep.subr.bf16.mxu0 0
    %504 = vmatpush1.bf16.msra.mxu0 0
    %505 = vmatprep.subr.bf16.mxu0 0
    %506 = vmatpush1.bf16.msra.mxu0 0
    %507 = vmatprep.subr.bf16.mxu0 0
    %508 = vmatpush1.bf16.msra.mxu0 0
    %509 = vmatprep.subr.bf16.mxu0 0
    %510 = vmatpush1.bf16.msra.mxu0 0
    %511 = vmatprep.mubr.bf16.mxu0 0
    %512 = vmatmul.mubr.bf16.gmra.mrb[0].mxu0 %v470
    %v513 = vpop.f32.mrb[0].mxu0
    %v514 = vadd.f32 0.0, %v513
    %v515 = vpop.f32.mrb[0].mxu0
    %v516 = vpop.f32.mrb[0].mxu0
    %v517 = vpop.f32.mrb[0].mxu0
    %518 = vdwg.mxu0
    %v519 = vpack.c.bf16 %v514, %v514
    %v520 = vld [vmem:[%s4] sm:$0xf]
    %v521 = vld [vmem:[%s4 + $0x4] sm:$0xf]
    %v522 = vld [vmem:[%s4 + $0x8] sm:$0xf]
    %v523 = vld [vmem:[%s4 + $0xc] sm:$0xf]
    %v524 = vld [vmem:[%s4 + $0x10] sm:$0xf]
    %v525 = vld [vmem:[%s4 + $0x14] sm:$0xf]
    %v526 = vld [vmem:[%s4 + $0x18] sm:$0xf]
    %v527 = vld [vmem:[%s4 + $0x1c] sm:$0xf]
    %v528 = vld [vmem:[%s4 + $0x20] sm:$0xf]
    %v529 = vld [vmem:[%s4 + $0x24] sm:$0xf]
    %v530 = vld [vmem:[%s4 + $0x28] sm:$0xf]
    %v531 = vld [vmem:[%s4 + $0x2c] sm:$0xf]
    %v532 = vld [vmem:[%s4 + $0x30] sm:$0xf]
    %v533 = vld [vmem:[%s4 + $0x34] sm:$0xf]
    %v534 = vld [vmem:[%s4 + $0x38] sm:$0xf]
    %v535 = vld [vmem:[%s4 + $0x3c] sm:$0xf]
    %v536 = vld [vmem:[%s5] sm:$0x1]
    %v538 = vlaneseq
    %v539 = vshrl.u32 %v538, 7
    %v540 = vsub.s32 0, %v539
    %v541 = vrot.slane %v536, %v540
    %v559 = vunpack.c.l.b16 %v520
    %v560 = vunpack.c.l.b16 %v521
    %v561 = vunpack.c.l.b16 %v522
    %v562 = vunpack.c.l.b16 %v523
    %v563 = vunpack.c.l.b16 %v524
    %v564 = vunpack.c.l.b16 %v525
    %v565 = vunpack.c.l.b16 %v526
    %v566 = vunpack.c.l.b16 %v527
    %v567 = vunpack.c.l.b16 %v528
    %v568 = vunpack.c.l.b16 %v529
    %v569 = vunpack.c.l.b16 %v530
    %v570 = vunpack.c.l.b16 %v531
    %v571 = vunpack.c.l.b16 %v532
    %v572 = vunpack.c.l.b16 %v533
    %v573 = vunpack.c.l.b16 %v534
    %v574 = vunpack.c.l.b16 %v535
    %v575 = vpack.c.b16 %v560, %v559
    %v576 = vpack.c.b16 %v562, %v561
    %v577 = vpack.c.b16 %v564, %v563
    %v578 = vpack.c.b16 %v566, %v565
    %v579 = vpack.c.b16 %v568, %v567
    %v580 = vpack.c.b16 %v570, %v569
    %v581 = vpack.c.b16 %v572, %v571
    %v582 = vpack.c.b16 %v574, %v573
    %591 = vmatprep.subr.bf16.mxu0 0
    %592 = vmatpush1.bf16.msra.mxu0 %v575
    %593 = vmatprep.subr.bf16.mxu0 0
    %594 = vmatpush1.bf16.msra.mxu0 %v576
    %595 = vmatprep.subr.bf16.mxu0 0
    %596 = vmatpush1.bf16.msra.mxu0 %v577
    %597 = vmatprep.subr.bf16.mxu0 0
    %598 = vmatpush1.bf16.msra.mxu0 %v578
    %599 = vmatprep.subr.bf16.mxu0 0
    %600 = vmatpush1.bf16.msra.mxu0 %v579
    %601 = vmatprep.subr.bf16.mxu0 0
    %602 = vmatpush1.bf16.msra.mxu0 %v580
    %603 = vmatprep.subr.bf16.mxu0 0
    %604 = vmatpush1.bf16.msra.mxu0 %v581
    %605 = vmatprep.subr.bf16.mxu0 0
    %606 = vmatpush1.bf16.msra.mxu0 %v582
    %607 = vmatprep.subr.bf16.mxu0 0
    %608 = vmatpush1.bf16.msra.mxu0 0
    %609 = vmatprep.subr.bf16.mxu0 0
    %610 = vmatpush1.bf16.msra.mxu0 0
    %611 = vmatprep.subr.bf16.mxu0 0
    %612 = vmatpush1.bf16.msra.mxu0 0
    %613 = vmatprep.subr.bf16.mxu0 0
    %614 = vmatpush1.bf16.msra.mxu0 0
    %615 = vmatprep.subr.bf16.mxu0 0
    %616 = vmatpush1.bf16.msra.mxu0 0
    %617 = vmatprep.subr.bf16.mxu0 0
    %618 = vmatpush1.bf16.msra.mxu0 0
    %619 = vmatprep.subr.bf16.mxu0 0
    %620 = vmatpush1.bf16.msra.mxu0 0
    %621 = vmatprep.subr.bf16.mxu0 0
    %622 = vmatpush1.bf16.msra.mxu0 0
    %623 = vmatprep.mubr.bf16.mxu0 0
    %624 = vmatmul.mubr.bf16.gmra.mrb[0].mxu0 %v519
    %v625 = vpop.f32.mrb[0].mxu0
    %v626 = vadd.f32 %v541, %v625
    %v627 = vpop.f32.mrb[0].mxu0
    %v628 = vpop.f32.mrb[0].mxu0
    %v629 = vpop.f32.mrb[0].mxu0
    %630 = vdwg.mxu0
    %v631 = vpack.c.bf16 %v626, %v626
    %v632 = vld [vmem:[%s6] sm:$0xf]
    %v633 = vld [vmem:[%s6 + $0x4] sm:$0xf]
    %v634 = vld [vmem:[%s6 + $0x8] sm:$0xf]
    %v635 = vld [vmem:[%s6 + $0xc] sm:$0xf]
    %v636 = vld [vmem:[%s7] sm:$0x1]
    %v638 = vlaneseq
    %v639 = vshrl.u32 %v638, 7
    %v640 = vsub.s32 0, %v639
    %v641 = vrot.slane %v636, %v640
    %v647 = vunpack.c.l.b16 %v632
    %v648 = vunpack.c.l.b16 %v633
    %v649 = vunpack.c.l.b16 %v634
    %v650 = vunpack.c.l.b16 %v635
    %v651 = vpack.c.b16 %v648, %v647
    %v652 = vpack.c.b16 %v650, %v649
    %vm655 = vcmask 261120
    %v657 = vsel %vm655, %v631, 0
    %659 = vmatprep.subr.bf16.mxu0 0
    %660 = vmatpush1.bf16.msra.mxu0 %v651
    %661 = vmatprep.subr.bf16.mxu0 0
    %662 = vmatpush1.bf16.msra.mxu0 %v652
    %663 = vmatprep.subr.bf16.mxu0 0
    %664 = vmatpush1.bf16.msra.mxu0 0
    %665 = vmatprep.subr.bf16.mxu0 0
    %666 = vmatpush1.bf16.msra.mxu0 0
    %667 = vmatprep.subr.bf16.mxu0 0
    %668 = vmatpush1.bf16.msra.mxu0 0
    %669 = vmatprep.subr.bf16.mxu0 0
    %670 = vmatpush1.bf16.msra.mxu0 0
    %671 = vmatprep.subr.bf16.mxu0 0
    %672 = vmatpush1.bf16.msra.mxu0 0
    %673 = vmatprep.subr.bf16.mxu0 0
    %674 = vmatpush1.bf16.msra.mxu0 0
    %675 = vmatprep.subr.bf16.mxu0 0
    %676 = vmatpush1.bf16.msra.mxu0 0
    %677 = vmatprep.subr.bf16.mxu0 0
    %678 = vmatpush1.bf16.msra.mxu0 0
    %679 = vmatprep.subr.bf16.mxu0 0
    %680 = vmatpush1.bf16.msra.mxu0 0
    %681 = vmatprep.subr.bf16.mxu0 0
    %682 = vmatpush1.bf16.msra.mxu0 0
    %683 = vmatprep.subr.bf16.mxu0 0
    %684 = vmatpush1.bf16.msra.mxu0 0
    %685 = vmatprep.subr.bf16.mxu0 0
    %686 = vmatpush1.bf16.msra.mxu0 0
    %687 = vmatprep.subr.bf16.mxu0 0
    %688 = vmatpush1.bf16.msra.mxu0 0
    %689 = vmatprep.subr.bf16.mxu0 0
    %690 = vmatpush1.bf16.msra.mxu0 0
    %691 = vmatprep.mubr.bf16.mxu0 0
    %692 = vmatmul.mubr.bf16.gmra.mrb[0].mxu0 %v657
    %v693 = vpop.f32.mrb[0].mxu0
    %v694 = vadd.f32 %v641, %v693
    %v695 = vpop.f32.mrb[0].mxu0
    %v696 = vpop.f32.mrb[0].mxu0
    %v697 = vpop.f32.mrb[0].mxu0
    %698 = vdwg.mxu0
    %vm699 = vcmp.gt.f32.partialorder %v694, 0.0
    %v700 = vmin.f32 %v694, 0.0
    %v701 = vmul.f32 %v700, 1.442695
    %v702 = vpow.pop %v701
    %v703 = vsub.f32 %v702, 1.0
    %v704 = vmul.f32 %v703, 1.6732632
    %v705 = vsel %vm699, %v694, %v704
    %v706 = vmul.f32 %v705, 1.050701
    %v707 = vpack.c.bf16 %v706, %v706
    %v708 = vld [vmem:[%s8] sm:$0xf]
    %v709 = vld [vmem:[%s8 + $0x4] sm:$0xf]
    %v710 = vld [vmem:[%s8 + $0x8] sm:$0xf]
    %v711 = vld [vmem:[%s8 + $0xc] sm:$0xf]
    %v712 = vld [vmem:[%s9] sm:$0x1]
    %v714 = vlaneseq
    %v715 = vshrl.u32 %v714, 7
    %v716 = vsub.s32 0, %v715
    %v717 = vrot.slane %v712, %v716
    %v723 = vunpack.c.l.b16 %v708
    %v724 = vunpack.c.l.b16 %v709
    %v725 = vunpack.c.l.b16 %v710
    %v726 = vunpack.c.l.b16 %v711
    %v727 = vpack.c.b16 %v724, %v723
    %v728 = vpack.c.b16 %v726, %v725
    %v732 = vsel %vm655, %v707, 0
    %734 = vmatprep.subr.bf16.mxu0 0
    %735 = vmatpush1.bf16.msra.mxu0 %v727
    %736 = vmatprep.subr.bf16.mxu0 0
    %737 = vmatpush1.bf16.msra.mxu0 %v728
    %738 = vmatprep.subr.bf16.mxu0 0
    %739 = vmatpush1.bf16.msra.mxu0 0
    %740 = vmatprep.subr.bf16.mxu0 0
    %741 = vmatpush1.bf16.msra.mxu0 0
    %742 = vmatprep.subr.bf16.mxu0 0
    %743 = vmatpush1.bf16.msra.mxu0 0
    %744 = vmatprep.subr.bf16.mxu0 0
    %745 = vmatpush1.bf16.msra.mxu0 0
    %746 = vmatprep.subr.bf16.mxu0 0
    %747 = vmatpush1.bf16.msra.mxu0 0
    %748 = vmatprep.subr.bf16.mxu0 0
    %749 = vmatpush1.bf16.msra.mxu0 0
    %750 = vmatprep.subr.bf16.mxu0 0
    %751 = vmatpush1.bf16.msra.mxu0 0
    %752 = vmatprep.subr.bf16.mxu0 0
    %753 = vmatpush1.bf16.msra.mxu0 0
    %754 = vmatprep.subr.bf16.mxu0 0
    %755 = vmatpush1.bf16.msra.mxu0 0
    %756 = vmatprep.subr.bf16.mxu0 0
    %757 = vmatpush1.bf16.msra.mxu0 0
    %758 = vmatprep.subr.bf16.mxu0 0
    %759 = vmatpush1.bf16.msra.mxu0 0
    %760 = vmatprep.subr.bf16.mxu0 0
    %761 = vmatpush1.bf16.msra.mxu0 0
    %762 = vmatprep.subr.bf16.mxu0 0
    %763 = vmatpush1.bf16.msra.mxu0 0
    %764 = vmatprep.subr.bf16.mxu0 0
    %765 = vmatpush1.bf16.msra.mxu0 0
    %766 = vmatprep.mubr.bf16.mxu0 0
    %767 = vmatmul.mubr.bf16.gmra.mrb[0].mxu0 %v732
    %v768 = vpop.f32.mrb[0].mxu0
    %v769 = vadd.f32 %v717, %v768
    %v770 = vpop.f32.mrb[0].mxu0
    %v771 = vpop.f32.mrb[0].mxu0
    %v772 = vpop.f32.mrb[0].mxu0
    %773 = vdwg.mxu0
    %774 = vst [vmem:[#allocation2] sm:$0xff] %v769
    // Predicated region
    $region42: #{tpu_custom_call.1} parent=1 // pred_check
      _
    $region43: #{tpu_custom_call.1} parent=1 // pred_check_branch
      %776 = sbr.rel (0) target = $region45
    $region44: #{tpu_custom_call.1} parent=1 // pred_region
      %s778 = ssub.s32 128, 128
      %779 = vsyncadd [#allocation3], %s778
      %s781 = sshll.u32 [#allocation2], 4
      %s782 = int_to_ptr.vmem [resolvable:$true] %s781
      %784 = dma.vmem_to_hbm [thread:$0]  %s782, 128, %s10, [#allocation3]
    $region45: #{tpu_custom_call.1} parent=1 // pred_fallthru
      _
    // Predicated region
    $region46: #{tpu_custom_call.1} parent=1 // pred_check
      _
    $region47: #{tpu_custom_call.1} parent=1 // pred_check_branch
      %786 = sbr.rel (0) target = $region49
    $region48: #{tpu_custom_call.1} parent=1 // pred_region
      %787 = dma.done [#allocation3], 128
    $region49: #{tpu_custom_call.1} parent=1 // pred_fallthru
      _
    %788 = vsyncpa [#allocation3], 1

</llo_original>
